<compile_context>
chip_gen: v5e
topology: v5e:2x2
jax: 0.10.0
libtpu: 0.0.40
codegen_flags: <defaults>
</compile_context>

<pallas_src>
import jax
import jax.numpy as jnp
from jax.experimental import pallas as pl
from jax.experimental.pallas import tpu as pltpu


def _broadcast_kernel(const_ref, out_ref):
    # const_ref: (1, F)  lane-dense constant, resident in VMEM across all steps
    # out_ref:   (BB, F) lane-dense output rows for this batch block
    out_ref[...] = jnp.broadcast_to(const_ref[...], out_ref.shape)


def constant_input_forward(x, const_param):
    """Reproduces ConstantInput.forward: repeat const_param along batch.

    x:           any NCHW array; only x.shape[0] (batch) is used.
    const_param: (1, C, S, S) parameter.
    returns:     (batch, C, S, S) array, dtype of const_param.
    """
    batch = x.shape[0]
    _, C, S, S2 = const_param.shape
    assert S == S2

    # Lane-dense 2-D view of the problem.
    F = C * S * S
    const2d = const_param.reshape(1, F)
    itemsize = jnp.dtype(const_param.dtype).itemsize

    # Pick a batch block BB so the output block is ~4 MiB (double-buffered:
    # ~8 MiB, well under the default scoped-VMEM limit on all generations).
    target_block_bytes = 4 * 1024 * 1024
    rows_for_target = max(1, target_block_bytes // max(1, F * itemsize))
    if rows_for_target >= batch:
        bb = batch                      # single block covers the whole batch
    else:
        bb = max(8, (rows_for_target // 8) * 8)   # keep (8, 128) tiling legal
        bb = min(bb, batch)

    grid = (pl.cdiv(batch, bb),)

    out2d = pl.pallas_call(
        _broadcast_kernel,
        out_shape=jax.ShapeDtypeStruct((batch, F), const_param.dtype),
        grid_spec=pltpu.PrefetchScalarGridSpec(
            num_scalar_prefetch=0,
            grid=grid,
            in_specs=[
                # Constant: same (full) block every step -> stays resident in
                # VMEM, no per-step input DMA.
                pl.BlockSpec((1, F), lambda i: (0, 0)),
            ],
            # Lane-dense output slab: BB batch rows x full flat feature dim.
            out_specs=pl.BlockSpec((bb, F), lambda i: (i, 0)),
        ),
        compiler_params=pltpu.CompilerParams(
            dimension_semantics=("parallel",),
        ),
    )(const2d)

    return out2d.reshape(batch, C, S, S)


if __name__ == "__main__":
    key = jax.random.PRNGKey(0)
    k_param, k_x = jax.random.split(key)

    channel, size = 4, 4
    batch = 2

    # Deterministic "randn" parameter, matching nn.Parameter(torch.randn(1, C, S, S)).
    const_param = jax.random.normal(
        k_param, (1, channel, size, size), dtype=jnp.float32
    )

    # Input tensor: only its batch dim matters (values are ignored by forward).
    x = jax.random.normal(k_x, (batch, 4, 16, 16), dtype=jnp.float32)

    out = constant_input_forward(x, const_param)
    out = jax.block_until_ready(out)

    # Reference check: out[b] == const_param[0] for every b.
    ref = jnp.broadcast_to(const_param, (batch, channel, size, size))
    assert out.shape == (batch, channel, size, size)
    assert jnp.array_equal(out, ref)

    print("KERNEL_OK")
</pallas_src>

<mosaic_0001>
module attributes {stable_mosaic.version = 11 : i64} {
  func.func @_broadcast_kernel(%arg0: i32, %arg1: memref<1x64xf32, #tpu.memory_space<vmem>>, %arg2: memref<2x64xf32, #tpu.memory_space<vmem>>) attributes {dimension_semantics = [#tpu.dimension_semantics<parallel>], iteration_bounds = array<i64: 1>, scalar_prefetch = 0 : i64, scratch_operands = 0 : i64, tpu.core_type = #tpu.core_type<tc>, window_params = [{pipeline_mode = #tpu.pipeline_mode<synchronous>, transform_indices = @transform_0, window_bounds = array<i64: 1, 64>}, {transform_indices = @transform_1, window_bounds = array<i64: 2, 64>}]} {
    %c0 = arith.constant 0 : index
    %c0_0 = arith.constant 0 : index
    %0 = vector.load %arg1[%c0, %c0_0] : memref<1x64xf32, #tpu.memory_space<vmem>>, vector<1x64xf32>
    %1 = vector.shape_cast %0 : vector<1x64xf32> to vector<1x64xf32>
    %2 = vector.broadcast %1 : vector<1x64xf32> to vector<2x64xf32>
    %c0_1 = arith.constant 0 : index
    %c0_2 = arith.constant 0 : index
    %3 = vector.load %arg2[%c0_1, %c0_2] : memref<2x64xf32, #tpu.memory_space<vmem>>, vector<2x64xf32>
    tpu.vector_store %arg2[%c0_1, %c0_2], %2 {strides = array<i32>} : memref<2x64xf32, #tpu.memory_space<vmem>>, vector<2x64xf32>,
    return
  }
  func.func @transform_0(%arg0: i32) -> (i32, i32) {
    %c0_i32 = arith.constant 0 : i32
    %c0_i32_0 = arith.constant 0 : i32
    %c0_i32_1 = arith.constant 0 : i32
    return %c0_i32, %c0_i32_0 : i32, i32
  }
  func.func @transform_1(%arg0: i32) -> (i32, i32) {
    %c0_i32 = arith.constant 0 : i32
    %c0_i32_0 = arith.constant 0 : i32
    return %arg0, %c0_i32 : i32, i32
  }
}

</mosaic_0001>

<llo_original>
// kernel: tpu_custom_call.1
$region0: #{tpu_custom_call.1}
  #allocation0 [shape = 'u32[]', space=smem, size = 0x4, offset = 0x4, fixed_abs, tag = 'smem constant byte address 0x4 - core index']
  #allocation1 [shape = 'u32[72,128]{1,0:T(1,128)}', space=vmem, size = 0x9000, scoped, tag = 'internal scratch']
  %s0 = inlined_call_operand.hbm [shape: f32[1,64], index: 0, kind: input, shape index: {}]
  %s1 = inlined_call_operand.hbm [shape: f32[2,64], index: 1, kind: output, shape index: {}]
  %s2 = sld [smem:[#allocation0]]
  $region18: #{tpu_custom_call.1} parent=0
    _
  %s4 = ssub.s32 1, %s2
  %s5 = scalar_select 0, %s4, %s2
  $region1: #{tpu_custom_call.1} parent=0
    #allocation2 [shape = 'u8[512]{0}', space=vmem, size = 0x400, scoped, tag = 'input window, operand 0, single buffered']
    #allocation3 [shape = 's32[1]{0}', space=sflag, size = 0x4, scoped, tag = 'scoped memory for tpu_custom_call.1']
    #allocation4 [shape = 's32[1]{0}', space=sflag, size = 0x4, scoped, tag = 'scoped memory for tpu_custom_call.1']
    #allocation5 [shape = 'u8[1024]{0}', space=vmem, size = 0x400, scoped, tag = 'output window, operand 0, single buffered']
    %6 = vsyncpa [#allocation3], 0
    %7 = vsyncpa [#allocation4], 0
    // Predicated region
    $region2: #{tpu_custom_call.1} parent=1 // pred_check
      _
    $region3: #{tpu_custom_call.1} parent=1 // pred_check_branch
      %9 = sbr.rel (0) target = $region5
    $region4: #{tpu_custom_call.1} parent=1 // pred_region
      %11 = vsyncadd [#allocation3], 0
      %s13 = sshll.u32 %s0, 4
      %s14 = int_to_ptr.hbm [resolvable:$true] %s13
      %s15 = sshll.u32 [#allocation2], 4
      %s16 = int_to_ptr.vmem [resolvable:$true] %s15
      %18 = dma.hbm_to_vmem [thread:$0]  %s14, 16, %s16, [#allocation3]
    $region5: #{tpu_custom_call.1} parent=1 // pred_fallthru
      _
    // Predicated region
    $region6: #{tpu_custom_call.1} parent=1 // pred_check
      _
    $region7: #{tpu_custom_call.1} parent=1 // pred_check_branch
      %20 = sbr.rel (0) target = $region9
    $region8: #{tpu_custom_call.1} parent=1 // pred_region
      %22 = dma.done [#allocation3], 16
    $region9: #{tpu_custom_call.1} parent=1 // pred_fallthru
      _
    %v23 = vld [vmem:[#allocation2] sm:$0x1]
    %v25 = vperm.slane %v23, 0
    %vm27 = vcmask 517120
    %28 = vst.msk [vmem:[#allocation5] sm:$0x3] %vm27, %v25
    // Predicated region
    $region10: #{tpu_custom_call.1} parent=1 // pred_check
      _
    $region11: #{tpu_custom_call.1} parent=1 // pred_check_branch
      %30 = sbr.rel (0) target = $region13
    $region12: #{tpu_custom_call.1} parent=1 // pred_region
      %32 = vsyncadd [#allocation4], 0
      %s34 = sshll.u32 [#allocation5], 4
      %s35 = int_to_ptr.vmem [resolvable:$true] %s34
      %s36 = sshll.u32 %s1, 4
      %s37 = int_to_ptr.hbm [resolvable:$true] %s36
      %39 = dma.vmem_to_hbm [thread:$0]  %s35, 32, %s37, [#allocation4]
    $region13: #{tpu_custom_call.1} parent=1 // pred_fallthru
      _
    // Predicated region
    $region14: #{tpu_custom_call.1} parent=1 // pred_check
      _
    $region15: #{tpu_custom_call.1} parent=1 // pred_check_branch
      %41 = sbr.rel (0) target = $region17
    $region16: #{tpu_custom_call.1} parent=1 // pred_region
      %43 = dma.done [#allocation4], 32
    $region17: #{tpu_custom_call.1} parent=1 // pred_fallthru
      _
    %44 = vsyncpa [#allocation3], 1
    %45 = vsyncpa [#allocation4], 1

</llo_original>
